<compile_context>
chip_gen: v5e
topology: v5e:2x2
jax: 0.10.0
libtpu: 0.0.40
codegen_flags: <defaults>
</compile_context>

<pallas_src>
import math

import jax
import jax.numpy as jnp
import numpy as np
from jax.experimental import pallas as pl
from jax.experimental.pallas import tpu as pltpu


# ----------------------------------------------------------------------------
# Pallas kernel: one MXU matmul (3 conv taps fused over K = 3*C_in) + pe add
# ----------------------------------------------------------------------------
def data_embedding_kernel(lhs_ref, w_ref, pe_ref, o_ref):
    # lhs_ref: (Bt, L, 3*C_in)  channel-concatenated [x(l-1), x(l), x(l+1)]
    # w_ref  : (3*C_in, TN)     stacked conv taps [W0; W1; W2], D-tile
    # pe_ref : (L, TN)          positional embedding tile (+ conv bias folded in)
    # o_ref  : (Bt, L, TN)
    bt, L, c3 = lhs_ref.shape
    tn = w_ref.shape[1]
    # Merging (Bt, L) is a free view when L % 8 == 0 (typical seq lens); for
    # other L it is a VMEM-local relayout only, never extra HBM traffic.
    lhs2 = lhs_ref[...].reshape(bt * L, c3)
    acc = jnp.dot(lhs2, w_ref[...], preferred_element_type=jnp.float32)
    acc = acc.reshape(bt, L, tn) + pe_ref[...]        # bias already folded in
    # TODO(synk): nn.Dropout(p=0.1) is identity at inference; training-mode
    # dropout (pltpu.prng_seed / prng_random_bits + 1/(1-p) scaling) not applied.
    o_ref[...] = acc.astype(o_ref.dtype)


# ----------------------------------------------------------------------------
# Tiling helpers
# ----------------------------------------------------------------------------
def _vmem_capacity_bytes():
    try:
        return int(pltpu.get_tpu_info().vmem_capacity_bytes)
    except Exception:
        return 64 << 20   # conservative (v7x-sized) fallback


def _pick_d_tile(D):
    """Lane-axis tile: multiple of 128 dividing D when possible, else full D."""
    if D % 128 == 0:
        for cand in (512, 384, 256, 128):
            if D % cand == 0:
                return cand
    return D              # masked store; no pad, no post-kernel slice


def _pick_batch_tile(batch, per_row_bytes, target_bytes, require_multi_step):
    """Largest divisor of `batch` whose output tile stays near `target_bytes`."""
    cap = max(1, target_bytes // max(1, per_row_bytes))
    if require_multi_step and batch >= 2:
        cap = min(cap, batch // 2)    # guarantee >= 2 grid steps (megacore / pipelining)
    bt = 1
    for d in range(1, batch + 1):
        if batch % d == 0 and d <= cap:
            bt = d
    return bt


# ----------------------------------------------------------------------------
# Wrapper
# ----------------------------------------------------------------------------
def data_embedding(x, weight, bias, pe, *, out_dtype=jnp.float32):
    """x: (B, L, C_in) f32; weight: (D, C_in, 3); bias: (D,); pe: (max_len, D)."""
    B, L, C_in = x.shape
    D = weight.shape[0]

    # --- wrapper-side layout plumbing (x is tiny vs. the output) -------------
    # circular conv k=3 pad=1: out[l] = W0 @ x[(l-1)%L] + W1 @ x[l] + W2 @ x[(l+1)%L] + b
    x_m1 = jnp.roll(x, 1, axis=1)
    x_p1 = jnp.roll(x, -1, axis=1)
    lhs = jnp.concatenate([x_m1, x, x_p1], axis=-1)                    # (B, L, 3C)
    w_cat = jnp.concatenate(
        [weight[:, :, 0].T, weight[:, :, 1].T, weight[:, :, 2].T], axis=0)  # (3C, D)
    pe_b = pe[:L, :] + bias[None, :]                                   # (L, D)

    # --- tiling ---------------------------------------------------------------
    out_itemsize = jnp.dtype(out_dtype).itemsize
    TN = _pick_d_tile(D)
    d_steps = D // TN

    vmem_cap = _vmem_capacity_bytes()
    target = (8 << 20) if vmem_cap >= (100 << 20) else (4 << 20)   # v5e/v6e vs v7x
    Bt = _pick_batch_tile(B, L * TN * out_itemsize, target,
                          require_multi_step=(d_steps == 1))
    b_steps = B // Bt

    # Explicit VMEM budget: double-buffered lhs/w/pe/out tiles + headroom.
    tile_bytes = 2 * (Bt * L * 3 * C_in * 4
                      + 3 * C_in * TN * 4
                      + L * TN * 4
                      + Bt * L * TN * out_itemsize)
    vmem_limit = int(min(max(tile_bytes + (4 << 20), 32 << 20),
                         vmem_cap - (8 << 20)))

    # Grid: d outer, b inner -> w/pe block index is constant across the inner
    # axis and is not re-fetched per batch tile; lhs re-reads (d_steps x its
    # tiny size) are negligible.  Both axes are independent -> "parallel".
    # NOTE: w/pe could additionally use pipeline_mode=pl.Buffered(1) to drop one
    # buffer copy; left at the default double-buffering for portability.
    grid = (d_steps, b_steps)

    out = pl.pallas_call(
        data_embedding_kernel,
        out_shape=jax.ShapeDtypeStruct((B, L, D), out_dtype),
        grid_spec=pltpu.PrefetchScalarGridSpec(
            num_scalar_prefetch=0,
            grid=grid,
            in_specs=[
                pl.BlockSpec((Bt, L, 3 * C_in), lambda d, b: (b, 0, 0)),
                pl.BlockSpec((3 * C_in, TN),    lambda d, b: (0, d)),
                pl.BlockSpec((L, TN),           lambda d, b: (0, d)),
            ],
            out_specs=pl.BlockSpec((Bt, L, TN), lambda d, b: (b, 0, d)),
        ),
        compiler_params=pltpu.CompilerParams(
            dimension_semantics=("parallel", "parallel"),
            vmem_limit_bytes=vmem_limit),
    )(lhs, w_cat, pe_b)
    return out


# ----------------------------------------------------------------------------
# Parameter / buffer construction (mirrors the PyTorch __init__)
# ----------------------------------------------------------------------------
def make_positional_embedding(dim_model, max_len=5000):
    position = jnp.arange(max_len, dtype=jnp.float32)[:, None]          # (max_len, 1)
    div_term = jnp.exp(jnp.arange(0, dim_model, 2, dtype=jnp.float32)
                       * (-(math.log(10000.0) / dim_model)))            # (ceil(D/2),)
    pe = jnp.zeros((max_len, dim_model), dtype=jnp.float32)
    pe = pe.at[:, 0::2].set(jnp.sin(position * div_term))
    # Guard for odd dim_model (cos part has one fewer column than sin part).
    pe = pe.at[:, 1::2].set(jnp.cos(position * div_term)[:, : dim_model // 2])
    return pe


def make_conv_params(key, c_in, dim_model):
    # kaiming_normal_(mode='fan_in', nonlinearity='leaky_relu') + default bias init
    k_w, k_b = jax.random.split(key)
    fan_in = c_in * 3
    gain = math.sqrt(2.0 / (1.0 + 0.01 ** 2))
    std = gain / math.sqrt(fan_in)
    weight = std * jax.random.normal(k_w, (dim_model, c_in, 3), dtype=jnp.float32)
    bound = 1.0 / math.sqrt(fan_in)
    bias = jax.random.uniform(k_b, (dim_model,), dtype=jnp.float32,
                              minval=-bound, maxval=bound)
    return weight, bias


# plain-JAX reference for a sanity check
def reference(x, weight, bias, pe):
    x_m1 = jnp.roll(x, 1, axis=1)
    x_p1 = jnp.roll(x, -1, axis=1)
    out = (jnp.einsum('blc,dc->bld', x_m1, weight[:, :, 0])
           + jnp.einsum('blc,dc->bld', x, weight[:, :, 1])
           + jnp.einsum('blc,dc->bld', x_p1, weight[:, :, 2])
           + bias[None, None, :]
           + pe[None, :x.shape[1], :])
    return out


if __name__ == "__main__":
    B, L, C_IN, D = 2, 8, 4, 32

    key = jax.random.PRNGKey(0)
    k_x, k_p = jax.random.split(key)
    x = jax.random.normal(k_x, (B, L, C_IN), dtype=jnp.float32)

    weight, bias = make_conv_params(k_p, C_IN, D)
    pe = make_positional_embedding(D, max_len=5000)

    out = data_embedding(x, weight, bias, pe)
    out = jax.block_until_ready(out)

    ref = reference(x, weight, bias, pe)
    np.testing.assert_allclose(np.asarray(out), np.asarray(ref),
                               rtol=1e-5, atol=1e-5)
    assert out.shape == (B, L, D)
    print("KERNEL_OK")
</pallas_src>

<mosaic_0001>
module attributes {stable_mosaic.version = 11 : i64} {
  func.func @data_embedding_kernel(%arg0: i32, %arg1: i32, %arg2: memref<1x8x12xf32, #tpu.memory_space<vmem>>, %arg3: memref<12x32xf32, #tpu.memory_space<vmem>>, %arg4: memref<8x32xf32, #tpu.memory_space<vmem>>, %arg5: memref<1x8x32xf32, #tpu.memory_space<vmem>>) attributes {dimension_semantics = [#tpu.dimension_semantics<parallel>, #tpu.dimension_semantics<parallel>], iteration_bounds = array<i64: 1, 2>, scalar_prefetch = 0 : i64, scratch_operands = 0 : i64, tpu.core_type = #tpu.core_type<tc>, window_params = [{transform_indices = @transform_0, window_bounds = array<i64: 1, 8, 12>}, {transform_indices = @transform_1, window_bounds = array<i64: 12, 32>}, {transform_indices = @transform_2, window_bounds = array<i64: 8, 32>}, {transform_indices = @transform_3, window_bounds = array<i64: 1, 8, 32>}]} {
    %c0 = arith.constant 0 : index
    %c0_0 = arith.constant 0 : index
    %c0_1 = arith.constant 0 : index
    %0 = vector.load %arg2[%c0, %c0_0, %c0_1] : memref<1x8x12xf32, #tpu.memory_space<vmem>>, vector<1x8x12xf32>
    %1 = vector.shape_cast %0 : vector<1x8x12xf32> to vector<8x12xf32>
    %c0_2 = arith.constant 0 : index
    %c0_3 = arith.constant 0 : index
    %2 = vector.load %arg3[%c0_2, %c0_3] : memref<12x32xf32, #tpu.memory_space<vmem>>, vector<12x32xf32>
    %cst = arith.constant dense<0.000000e+00> : vector<8x32xf32>
    %3 = tpu.matmul %1, %2, %cst {dimension_numbers = #tpu.dot_dimension_numbers<[1], [0], [0], [1], [0, 0, 1, 1], [], []>} : vector<8x12xf32>, vector<12x32xf32>, vector<8x32xf32> -> vector<8x32xf32>
    %4 = vector.shape_cast %3 : vector<8x32xf32> to vector<1x8x32xf32>
    %c0_4 = arith.constant 0 : index
    %c0_5 = arith.constant 0 : index
    %5 = vector.load %arg4[%c0_4, %c0_5] : memref<8x32xf32, #tpu.memory_space<vmem>>, vector<8x32xf32>
    %6 = vector.shape_cast %5 : vector<8x32xf32> to vector<1x8x32xf32>
    %7 = arith.addf %4, %6 : vector<1x8x32xf32>
    %c0_6 = arith.constant 0 : index
    %c0_7 = arith.constant 0 : index
    %c0_8 = arith.constant 0 : index
    %8 = vector.load %arg5[%c0_6, %c0_7, %c0_8] : memref<1x8x32xf32, #tpu.memory_space<vmem>>, vector<1x8x32xf32>
    tpu.vector_store %arg5[%c0_6, %c0_7, %c0_8], %7 {strides = array<i32>} : memref<1x8x32xf32, #tpu.memory_space<vmem>>, vector<1x8x32xf32>,
    return
  }
  func.func @transform_0(%arg0: i32, %arg1: i32) -> (i32, i32, i32) {
    %c0_i32 = arith.constant 0 : i32
    %c0_i32_0 = arith.constant 0 : i32
    %c0_i32_1 = arith.constant 0 : i32
    return %arg1, %c0_i32, %c0_i32_0 : i32, i32, i32
  }
  func.func @transform_1(%arg0: i32, %arg1: i32) -> (i32, i32) {
    %c0_i32 = arith.constant 0 : i32
    %c0_i32_0 = arith.constant 0 : i32
    return %c0_i32, %arg0 : i32, i32
  }
  func.func @transform_2(%arg0: i32, %arg1: i32) -> (i32, i32) {
    %c0_i32 = arith.constant 0 : i32
    %c0_i32_0 = arith.constant 0 : i32
    return %c0_i32, %arg0 : i32, i32
  }
  func.func @transform_3(%arg0: i32, %arg1: i32) -> (i32, i32, i32) {
    %c0_i32 = arith.constant 0 : i32
    %c0_i32_0 = arith.constant 0 : i32
    return %arg1, %c0_i32, %arg0 : i32, i32, i32
  }
}

</mosaic_0001>

<llo_original>
// kernel: tpu_custom_call.1
$region0: #{tpu_custom_call.1}
  #allocation0 [shape = 'u32[]', space=smem, size = 0x4, offset = 0x4, fixed_abs, tag = 'smem constant byte address 0x4 - core index']
  #allocation1 [shape = 'u32[72,128]{1,0:T(1,128)}', space=vmem, size = 0x9000, scoped, tag = 'internal scratch']
  %s0 = inlined_call_operand.hbm [shape: f32[2,8,12], index: 0, kind: input, shape index: {}]
  %s1 = inlined_call_operand.hbm [shape: f32[12,32], index: 1, kind: input, shape index: {}]
  %s2 = inlined_call_operand.hbm [shape: f32[8,32], index: 2, kind: input, shape index: {}]
  %s3 = inlined_call_operand.hbm [shape: f32[2,8,32], index: 3, kind: output, shape index: {}]
  %s4 = sld [smem:[#allocation0]]
  $region57: #{tpu_custom_call.1} parent=0
    _
  %s6 = ssub.s32 1, %s4
  %s7 = scalar_select 0, %s6, %s4
  $region1: #{tpu_custom_call.1} parent=0
    #allocation2 [shape = 'u8[8192]{0}', space=vmem, size = 0x2000, scoped, tag = 'input window, operand 0']
    #allocation3 [shape = 's32[2]{0}', space=sflag, size = 0x8, scoped, tag = 'scoped memory for tpu_custom_call.1']
    #allocation4 [shape = 's32[2]{0}', space=sflag, size = 0x8, scoped, tag = 'scoped memory for tpu_custom_call.1']
    #allocation5 [shape = 'u8[8192]{0}', space=vmem, size = 0x2000, scoped, tag = 'input window, operand 1, single buffered']
    #allocation6 [shape = 's32[1]{0}', space=sflag, size = 0x4, scoped, tag = 'scoped memory for tpu_custom_call.1']
    #allocation7 [shape = 'u8[4096]{0}', space=vmem, size = 0x1000, scoped, tag = 'input window, operand 2, single buffered']
    #allocation8 [shape = 'u8[8192]{0}', space=vmem, size = 0x2000, scoped, tag = 'output window, operand 0']
    %8 = vsyncpa [#allocation3], 0
    %s9 = scalar_lea.sflag [#allocation3], 1
    %10 = vsyncpa %s9, 0
    %11 = vsyncpa [#allocation6], 0
    %12 = vsyncpa [#allocation4], 0
    %s13 = scalar_lea.sflag [#allocation4], 1
    %14 = vsyncpa %s13, 0
    loop: start=0, step=1, limit=4
    $region2: #{tpu_custom_call.1} parent=1 // loop_pre_header
      _
    $region3: #{tpu_custom_call.1} parent=1 // loop_header
      %s16 = sphi 0, %s20
      %p17 = scmp.ge.s32.totalorder %s16, 4
      %s23 = sphi 0, %s35
      %s24 = sphi 0, %s31
      %s25 = sphi 0, %s23
      %s26 = sphi 0, %s24
      %s27 = sphi 0, %s25
      %s28 = sphi 0, %s26
      %s38 = sphi 0, %s40
      %s41 = sphi 0, %s38
      %s42 = sphi 0, %s41
      %s58 = sphi 0, %s42
      %s64 = sphi 0, %s66
      %s67 = sphi 0, %s64
      %s68 = sphi 0, %s67
      %s84 = sphi 0, %s68
      %s90 = sphi 0, %s92
      %s93 = sphi 0, %s90
      %s94 = sphi 0, %s93
      %s110 = sphi 0, %s94
      %s118 = sphi 0, %s120
      %s121 = sphi 0, %s118
      %s122 = sphi 0, %s121
      %s138 = sphi 0, %s122
    $region4: #{tpu_custom_call.1} parent=1 // loop_header_branch
      %19 = sbr.rel (%p17) target = $region8
    $region5: #{tpu_custom_call.1} parent=1 // loop_body
      %s21 = ssub.s32 %s16, 1
      %s22 = ssub.s32 %s16, 2
      %s29 = sadd.s32 1, %s24
      %p30 = scmp.ge.s32.totalorder %s29, 2
      %s31 = scalar_select %p30, 0, %s29
      %s32 = sadd.s32 1, %s23
      %s33 = scalar_select %p30, %s32, %s23
      %p34 = scmp.ge.s32.totalorder %s33, 1
      %s35 = scalar_select %p34, 0, %s33
      %s36 = ssub.s32 %s24, %s31
      %p37 = scmp.eq.s32.totalorder %s36, 0
      %s39 = sadd.s32 %s38, 1
      %s40 = scalar_select %p37, %s38, %s39
      %p43 = pneg %p37
      %p44 = scmp.eq.s32.totalorder %s16, 1
      %p45 = por %p43, %p44
      %p46 = scmp.ne.s32.totalorder %s38, %s41
      %p47 = scmp.eq.s32.totalorder %s16, 0
      %p48 = por %p46, %p47
      %p49 = scmp.ne.s32.totalorder %s38, %s41
      %p50 = scmp.eq.s32.totalorder %s21, 1
      %p51 = por %p49, %p50
      %p52 = scmp.ne.s32.totalorder %s41, %s42
      %p53 = scmp.eq.s32.totalorder %s21, 0
      %p54 = por %p52, %p53
      %p55 = scmp.ne.s32.totalorder %s41, %s42
      %p56 = scmp.eq.s32.totalorder %s22, 1
      %p57 = por %p55, %p56
      %p59 = scmp.ne.s32.totalorder %s42, %s58
      %p60 = scmp.eq.s32.totalorder %s22, 0
      %p61 = por %p59, %p60
      %s62 = ssub.s32 %s23, %s35
      %p63 = scmp.eq.s32.totalorder %s62, 0
      %s65 = sadd.s32 %s64, 1
      %s66 = scalar_select %p63, %s64, %s65
      %p69 = pneg %p63
      %p70 = scmp.eq.s32.totalorder %s16, 1
      %p71 = por %p69, %p70
      %p72 = scmp.ne.s32.totalorder %s64, %s67
      %p73 = scmp.eq.s32.totalorder %s16, 0
      %p74 = por %p72, %p73
      %p75 = scmp.ne.s32.totalorder %s64, %s67
      %p76 = scmp.eq.s32.totalorder %s21, 1
      %p77 = por %p75, %p76
      %p78 = scmp.ne.s32.totalorder %s67, %s68
      %p79 = scmp.eq.s32.totalorder %s21, 0
      %p80 = por %p78, %p79
      %p81 = scmp.ne.s32.totalorder %s67, %s68
      %p82 = scmp.eq.s32.totalorder %s22, 1
      %p83 = por %p81, %p82
      %p85 = scmp.ne.s32.totalorder %s68, %s84
      %p86 = scmp.eq.s32.totalorder %s22, 0
      %p87 = por %p85, %p86
      %s88 = ssub.s32 %s23, %s35
      %p89 = scmp.eq.s32.totalorder %s88, 0
      %s91 = sadd.s32 %s90, 1
      %s92 = scalar_select %p89, %s90, %s91
      %p95 = pneg %p89
      %p96 = scmp.eq.s32.totalorder %s16, 1
      %p97 = por %p95, %p96
      %p98 = scmp.ne.s32.totalorder %s90, %s93
      %p99 = scmp.eq.s32.totalorder %s16, 0
      %p100 = por %p98, %p99
      %p101 = scmp.ne.s32.totalorder %s90, %s93
      %p102 = scmp.eq.s32.totalorder %s21, 1
      %p103 = por %p101, %p102
      %p104 = scmp.ne.s32.totalorder %s93, %s94
      %p105 = scmp.eq.s32.totalorder %s21, 0
      %p106 = por %p104, %p105
      %p107 = scmp.ne.s32.totalorder %s93, %s94
      %p108 = scmp.eq.s32.totalorder %s22, 1
      %p109 = por %p107, %p108
      %p111 = scmp.ne.s32.totalorder %s94, %s110
      %p112 = scmp.eq.s32.totalorder %s22, 0
      %p113 = por %p111, %p112
      %s114 = ssub.s32 %s24, %s31
      %s115 = ssub.s32 %s23, %s35
      %s116 = sor.u32 %s114, %s115
      %p117 = scmp.eq.s32.totalorder %s116, 0
      %s119 = sadd.s32 %s118, 1
      %s120 = scalar_select %p117, %s118, %s119
      %p123 = pneg %p117
      %p124 = scmp.eq.s32.totalorder %s16, 1
      %p125 = por %p123, %p124
      %p126 = scmp.ne.s32.totalorder %s118, %s121
      %p127 = scmp.eq.s32.totalorder %s16, 0
      %p128 = por %p126, %p127
      %p129 = scmp.ne.s32.totalorder %s118, %s121
      %p130 = scmp.eq.s32.totalorder %s21, 1
      %p131 = por %p129, %p130
      %p132 = scmp.ne.s32.totalorder %s121, %s122
      %p133 = scmp.eq.s32.totalorder %s21, 0
      %p134 = por %p132, %p133
      %p135 = scmp.ne.s32.totalorder %s121, %s122
      %p136 = scmp.eq.s32.totalorder %s22, 1
      %p137 = por %p135, %p136
      %p139 = scmp.ne.s32.totalorder %s122, %s138
      %p140 = scmp.eq.s32.totalorder %s22, 0
      %p141 = por %p139, %p140
      %p142 = scmp.le.s32.totalorder 1, %s16
      %p143 = scmp.lt.s32.totalorder %s16, 3
      %p144 = pnand %p142, %p143
      %p145 = pneg %p144
      // Predicated region
      $region9: #{tpu_custom_call.1} parent=5 // pred_check
        _
      $region10: #{tpu_custom_call.1} parent=5 // pred_check_branch
        %147 = sbr.rel (%p144) target = $region12
      $region11: #{tpu_custom_call.1} parent=5 // pred_region
        %s148 = ssub.s32 %s16, 1
        // Predicated region
        $region13: #{tpu_custom_call.1} parent=11 // pred_check
          %p149 = pneg %p80
        $region14: #{tpu_custom_call.1} parent=11 // pred_check_branch
          %151 = sbr.rel (%p149) target = $region16
        $region15: #{tpu_custom_call.1} parent=11 // pred_region
          %153 = vsyncadd [#allocation6], 0
          %s154 = smul.addr %s25, 8
          %s155 = scalar_lea.hbm %s1, %s154
          %s156 = sshll.u32 %s155, 4
          %s157 = int_to_ptr.hbm [resolvable:$true] %s156
          %s158 = sshll.u32 [#allocation5], 4
          %s159 = int_to_ptr.vmem [resolvable:$true] %s158
          %164 = dma.hbm_to_vmem [thread:$0]  %s157, 256, %s159, [#allocation6], 128, 128, 8
        $region16: #{tpu_custom_call.1} parent=11 // pred_fallthru
          _
        // Predicated region
        $region17: #{tpu_custom_call.1} parent=11 // pred_check
          %p165 = pneg %p106
        $region18: #{tpu_custom_call.1} parent=11 // pred_check_branch
          %167 = sbr.rel (%p165) target = $region20
        $region19: #{tpu_custom_call.1} parent=11 // pred_region
          %169 = vsyncadd [#allocation6], 0
          %s170 = smul.addr %s25, 8
          %s171 = scalar_lea.hbm %s2, %s170
          %s173 = sshll.u32 %s171, 4
          %s174 = int_to_ptr.hbm [resolvable:$true] %s173
          %s175 = sshll.u32 [#allocation7], 4
          %s176 = int_to_ptr.vmem [resolvable:$true] %s175
          %178 = dma.hbm_to_vmem [thread:$0]  %s174, 128, %s176, [#allocation6]
        $region20: #{tpu_custom_call.1} parent=11 // pred_fallthru
          _
      $region12: #{tpu_custom_call.1} parent=5 // pred_fallthru
        _
      %p179 = scmp.lt.s32.totalorder %s16, 2
      // Predicated region
      $region21: #{tpu_custom_call.1} parent=5 // pred_check
        %p180 = pneg %p179
      $region22: #{tpu_custom_call.1} parent=5 // pred_check_branch
        %182 = sbr.rel (%p180) target = $region24
      $region23: #{tpu_custom_call.1} parent=5 // pred_region
        // Predicated region
        $region25: #{tpu_custom_call.1} parent=23 // pred_check
          %p183 = pneg %p48
        $region26: #{tpu_custom_call.1} parent=23 // pred_check_branch
          %185 = sbr.rel (%p183) target = $region28
        $region27: #{tpu_custom_call.1} parent=23 // pred_region
          %s186 = sand.u32 %s38, 1
          %s187 = scalar_lea.sflag [#allocation3], %s186
          %s188 = sand.u32 %s38, 1
          %s189 = smul.addr %s188, 8
          %s190 = scalar_lea.vmem [#allocation2], %s189
          %192 = vsyncadd %s187, 0
          %s193 = smul.addr %s24, 8
          %s194 = scalar_lea.hbm %s0, %s193
          %s196 = sshll.u32 %s194, 4
          %s197 = int_to_ptr.hbm [resolvable:$true] %s196
          %s198 = sshll.u32 %s190, 4
          %s199 = int_to_ptr.vmem [resolvable:$true] %s198
          %201 = dma.hbm_to_vmem [thread:$0]  %s197, 128, %s199, %s187
        $region28: #{tpu_custom_call.1} parent=23 // pred_fallthru
          _
      $region24: #{tpu_custom_call.1} parent=5 // pred_fallthru
        _
      %p202 = scmp.le.s32.totalorder 1, %s16
      %p203 = scmp.lt.s32.totalorder %s16, 3
      %p204 = pnand %p202, %p203
      %p205 = pneg %p204
      // Predicated region
      $region29: #{tpu_custom_call.1} parent=5 // pred_check
        _
      $region30: #{tpu_custom_call.1} parent=5 // pred_check_branch
        %207 = sbr.rel (%p204) target = $region32
      $region31: #{tpu_custom_call.1} parent=5 // pred_region
        %s208 = ssub.s32 %s16, 1
        %s209 = sand.u32 %s41, 1
        %s210 = scalar_lea.sflag [#allocation3], %s209
        %s211 = sand.u32 %s41, 1
        %s212 = smul.addr %s211, 8
        %s213 = scalar_lea.vmem [#allocation2], %s212
        // Predicated region
        $region33: #{tpu_custom_call.1} parent=31 // pred_check
          %p214 = pneg %p54
        $region34: #{tpu_custom_call.1} parent=31 // pred_check_branch
          %216 = sbr.rel (%p214) target = $region36
        $region35: #{tpu_custom_call.1} parent=31 // pred_region
          %218 = dma.done %s210, 128
        $region36: #{tpu_custom_call.1} parent=31 // pred_fallthru
          _
        // Predicated region
        $region37: #{tpu_custom_call.1} parent=31 // pred_check
          %p219 = pneg %p80
        $region38: #{tpu_custom_call.1} parent=31 // pred_check_branch
          %221 = sbr.rel (%p219) target = $region40
        $region39: #{tpu_custom_call.1} parent=31 // pred_region
          %223 = dma.done [#allocation6], 256
        $region40: #{tpu_custom_call.1} parent=31 // pred_fallthru
          _
        // Predicated region
        $region41: #{tpu_custom_call.1} parent=31 // pred_check
          %p224 = pneg %p106
        $region42: #{tpu_custom_call.1} parent=31 // pred_check_branch
          %226 = sbr.rel (%p224) target = $region44
        $region43: #{tpu_custom_call.1} parent=31 // pred_region
          %228 = dma.done [#allocation6], 128
        $region44: #{tpu_custom_call.1} parent=31 // pred_fallthru
          _
        %s229 = sand.u32 %s41, 1
        %s230 = scalar_lea.sflag [#allocation3], %s229
        %s231 = sand.u32 %s41, 1
        %s232 = smul.addr %s231, 8
        %s233 = scalar_lea.vmem [#allocation2], %s232
        %p234 = pneg %p54
        %p235 = pneg %p51
        %p236 = pneg %p80
        %p237 = pneg %p77
        %p238 = pneg %p106
        %p239 = pneg %p103
        %p240 = pneg %p134
        %p241 = pneg %p131
        %s242 = sand.u32 %s121, 1
        %s243 = scalar_lea.sflag [#allocation4], %s242
        %s244 = sand.u32 %s121, 1
        %s245 = smul.addr %s244, 8
        %s246 = scalar_lea.vmem [#allocation8], %s245
        %v247 = vld [vmem:[%s213] sm:$0xff]
        %v248 = vld [vmem:[#allocation5] sm:$0xff]
        %v249 = vld [vmem:[#allocation5 + $0x8] sm:$0xf]
        %vm250 = vcmask 97280
        %v252 = vsel %vm250, %v247, 0
        %vm254 = vcmask 1043456
        %v256 = vsel %vm254, %v249, 0
        %258 = vmatpush.msra.mxu0 0.0
        %259 = vmatpush.msra.mxu0 0.0
        %260 = vmatpush.msra.mxu0 0.0
        %261 = vmatpush.msra.mxu0 0.0
        %262 = vmatpush.msra.mxu0 0.0
        %263 = vmatpush.msra.mxu0 0.0
        %264 = vmatpush.msra.mxu0 0.0
        %265 = vmatpush.msra.mxu0 0.0
        %266 = vmatpush.msra.mxu0 0.0
        %267 = vmatpush.msra.mxu0 0.0
        %268 = vmatpush.msra.mxu0 0.0
        %269 = vmatpush.msra.mxu0 0.0
        %270 = vmatpush.msra.mxu0 0.0
        %271 = vmatpush.msra.mxu0 0.0
        %272 = vmatpush.msra.mxu0 %v256
        %273 = vmatpush.msra.mxu0 %v248
        %274 = vmatmul.f32.gmra.mxu0 %v252
        %v275 = vpop.f32.mrf.mxu0
        %v276 = vadd.f32 0.0, %v275
        %277 = vdwg.mxu0
        %v278 = vld [vmem:[#allocation7] sm:$0xff]
        %v279 = vadd.f32 %v276, %v278
        %vm280 = vcmask 261120
        %281 = vst.msk [vmem:[%s246] sm:$0xff] %vm280, %v279
        %s282 = sand.u32 %s121, 1
        %s283 = scalar_lea.sflag [#allocation4], %s282
        %s284 = sand.u32 %s121, 1
        %s285 = smul.addr %s284, 8
        %s286 = scalar_lea.vmem [#allocation8], %s285
        // Predicated region
        $region45: #{tpu_custom_call.1} parent=31 // pred_check
          %p287 = pneg %p131
        $region46: #{tpu_custom_call.1} parent=31 // pred_check_branch
          %289 = sbr.rel (%p287) target = $region48
        $region47: #{tpu_custom_call.1} parent=31 // pred_region
          %291 = vsyncadd %s283, 0
          %s292 = sadd.s32 %s25, %s26
          %s293 = smul.addr %s292, 8
          %s294 = scalar_lea.hbm %s3, %s293
          %s296 = sshll.u32 %s286, 4
          %s297 = int_to_ptr.vmem [resolvable:$true] %s296
          %s298 = sshll.u32 %s294, 4
          %s299 = int_to_ptr.hbm [resolvable:$true] %s298
          %301 = dma.vmem_to_hbm [thread:$0]  %s297, 128, %s299, %s283
        $region48: #{tpu_custom_call.1} parent=31 // pred_fallthru
          _
      $region32: #{tpu_custom_call.1} parent=5 // pred_fallthru
        _
      %p302 = scmp.le.s32.totalorder 2, %s16
      // Predicated region
      $region49: #{tpu_custom_call.1} parent=5 // pred_check
        %p303 = pneg %p302
      $region50: #{tpu_custom_call.1} parent=5 // pred_check_branch
        %305 = sbr.rel (%p303) target = $region52
      $region51: #{tpu_custom_call.1} parent=5 // pred_region
        %s306 = ssub.s32 %s16, 2
        // Predicated region
        $region53: #{tpu_custom_call.1} parent=51 // pred_check
          %p307 = pneg %p137
        $region54: #{tpu_custom_call.1} parent=51 // pred_check_branch
          %309 = sbr.rel (%p307) target = $region56
        $region55: #{tpu_custom_call.1} parent=51 // pred_region
          %s310 = sand.u32 %s122, 1
          %s311 = scalar_lea.sflag [#allocation4], %s310
          %s312 = sand.u32 %s122, 1
          %s313 = smul.addr %s312, 8
          %s314 = scalar_lea.vmem [#allocation8], %s313
          %316 = dma.done %s311, 128
        $region56: #{tpu_custom_call.1} parent=51 // pred_fallthru
          _
      $region52: #{tpu_custom_call.1} parent=5 // pred_fallthru
        _
    $region6: #{tpu_custom_call.1} parent=1 // loop_footer
      %s20 = sadd.s32 1, %s16
    $region7: #{tpu_custom_call.1} parent=1 // loop_footer_branch
      %15 = sbr.rel target = $region3
    $region8: #{tpu_custom_call.1} parent=1 // loop_exit
      _
    %317 = vsyncpa [#allocation3], 1
    %s318 = scalar_lea.sflag [#allocation3], 1
    %319 = vsyncpa %s318, 1
    %320 = vsyncpa [#allocation6], 1
    %321 = vsyncpa [#allocation4], 1
    %s322 = scalar_lea.sflag [#allocation4], 1
    %323 = vsyncpa %s322, 1

</llo_original>
